<compile_context>
chip_gen: v5e
topology: v5e:2x2
jax: 0.10.0
libtpu: 0.0.40
codegen_flags: <defaults>
</compile_context>

<pallas_src>
import functools

import jax
import jax.numpy as jnp
from jax import lax
from jax.experimental import pallas as pl
from jax.experimental.pallas import tpu as pltpu


# ---------------------------------------------------------------------------
# Fused SelfAttention kernel.  One batch element per grid step.
#   x_ref    : (1, N, D)    input hidden states
#   wqkv_ref : (D, 3D)      pre-transposed qkv weight (canonical K-major layout);
#                           columns ordered [q(h0..hH-1) | k(...) | v(...)], dh each.
#   wo_ref   : (D, D)       pre-transposed out_proj weight
#   bo_ref   : (1, D)       out_proj bias
#   o_ref    : (1, N, D)    output (already projected + bias)
#   ctx_ref  : (N, D) f32   VMEM scratch: per-head attention outputs assembled here
# ---------------------------------------------------------------------------
def _self_attention_kernel(x_ref, wqkv_ref, wo_ref, bo_ref, o_ref, ctx_ref, *,
                           num_heads, dim_head, scale, compute_dtype):
    D = num_heads * dim_head
    x = x_ref[0].astype(compute_dtype)                       # (N, D)

    # Fused QKV projection: one wide MXU matmul, qkv stays in VMEM (no HBM trip).
    qkv = jnp.dot(x, wqkv_ref[...].astype(compute_dtype),
                  preferred_element_type=jnp.float32)         # (N, 3D) f32

    # Per-head attention.  Head slices are STATIC lane offsets of the VMEM value.
    for h in range(num_heads):
        lo = h * dim_head
        hi = lo + dim_head
        q = qkv[:, lo:hi]
        k = qkv[:, D + lo:D + hi]
        v = qkv[:, 2 * D + lo:2 * D + hi]

        # scores = scale * q @ k^T  (contract last dims; MXU handles the NT form).
        s = lax.dot_general(
            q.astype(compute_dtype), k.astype(compute_dtype),
            (((1,), (1,)), ((), ())), preferred_element_type=jnp.float32,
        ) * scale

        # Numerically-stable softmax in f32 (exact divide, no approx reciprocal).
        s = s - jnp.max(s, axis=-1, keepdims=True)
        p = jnp.exp(s)
        p = p / jnp.sum(p, axis=-1, keepdims=True)

        o_h = jnp.dot(p.astype(compute_dtype), v.astype(compute_dtype),
                      preferred_element_type=jnp.float32)     # (N, dh)

        # Assemble the merged-head context in VMEM scratch (static column slice).
        ctx_ref[:, lo:hi] = o_h

    # Single full-width output projection + bias: (N, D) @ (D, D) on the MXU.
    out = jnp.dot(ctx_ref[...].astype(compute_dtype),
                  wo_ref[...].astype(compute_dtype),
                  preferred_element_type=jnp.float32)
    out = out + bo_ref[...].astype(jnp.float32)
    o_ref[0] = out.astype(o_ref.dtype)


# ---------------------------------------------------------------------------
# SelfAttention forward wrapper
# ---------------------------------------------------------------------------
def self_attention_forward(hidden_states, params, num_heads, *,
                           compute_dtype=jnp.bfloat16,
                           vmem_limit_bytes=48 * 1024 * 1024):
    B, N, D = hidden_states.shape
    dim_head = D // num_heads
    scale = dim_head ** (-0.5)

    # One-time weight pre-transposes in the wrapper (cheap XLA ops, hoisted under
    # jit) so the kernel's contractions are all canonical (K, N) -- no in-kernel
    # XLU weight transposes.
    wqkv_t = params["qkv_w"].T               # (D, 3D)
    wo_t = params["out_w"].T                 # (D, D)
    bo = params["out_b"].reshape(1, D)

    kernel = functools.partial(
        _self_attention_kernel, num_heads=num_heads, dim_head=dim_head,
        scale=scale, compute_dtype=compute_dtype)

    # TODO(synk): if D is not a multiple of 128 in production, fold B*N into the
    #             lane dim (or pad D) so the final store is an unmasked full-lane vst.
    return pl.pallas_call(
        kernel,
        out_shape=jax.ShapeDtypeStruct((B, N, D), hidden_states.dtype),
        grid=(B,),
        in_specs=[
            pl.BlockSpec((1, N, D), lambda b: (b, 0, 0)),       # x (per batch)
            pl.BlockSpec((D, 3 * D), lambda b: (0, 0)),         # qkv weight (resident)
            pl.BlockSpec((D, D), lambda b: (0, 0)),             # out weight (resident)
            pl.BlockSpec((1, D), lambda b: (0, 0)),             # out bias
        ],
        out_specs=pl.BlockSpec((1, N, D), lambda b: (b, 0, 0)),
        scratch_shapes=[pltpu.VMEM((N, D), jnp.float32)],       # merged-head context
        compiler_params=pltpu.CompilerParams(
            dimension_semantics=("parallel",),
            vmem_limit_bytes=vmem_limit_bytes,                  # safe on v5e/v6e/v7x
        ),
    )(hidden_states, wqkv_t, wo_t, bo)


# ---------------------------------------------------------------------------
# Pure-JAX reference (mirrors the torch module exactly) for a correctness check
# ---------------------------------------------------------------------------
def self_attention_reference(hidden_states, params, num_heads):
    B, N, D = hidden_states.shape
    dh = D // num_heads
    scale = dh ** (-0.5)
    qkv = hidden_states @ params["qkv_w"].T
    qkv = qkv.reshape(B, N, 3, num_heads, dh)
    qkv = jnp.transpose(qkv, (2, 0, 3, 1, 4)).reshape(3, B * num_heads, N, dh)
    q, k, v = qkv[0], qkv[1], qkv[2]
    scores = jnp.einsum("bqd,bkd->bqk", q, k) * scale
    probs = jax.nn.softmax(scores, axis=-1)
    hs = jnp.einsum("bqk,bkd->bqd", probs, v)
    hs = hs.reshape(B, num_heads, N, dh)
    hs = jnp.transpose(hs, (0, 2, 1, 3)).reshape(B, N, D)
    return hs @ params["out_w"].T + params["out_b"]


if __name__ == "__main__":
    # Small shapes consistent with the module: dim_query=32, num_heads=8 -> dim_head=4
    batch, seq, dim, num_heads = 2, 8, 32, 8

    key = jax.random.PRNGKey(0)
    k_x, k_qkv, k_ow, k_ob = jax.random.split(key, 4)

    x = jax.random.normal(k_x, (batch, seq, dim), dtype=jnp.float32)

    # Deterministic parameter init (shapes from nn.Linear in __init__; qkv bias=False)
    params = {
        "qkv_w": jax.random.normal(k_qkv, (3 * dim, dim), dtype=jnp.float32) * 0.05,
        "out_w": jax.random.normal(k_ow, (dim, dim), dtype=jnp.float32) * 0.05,
        "out_b": jax.random.normal(k_ob, (dim,), dtype=jnp.float32) * 0.05,
    }

    ref = self_attention_reference(x, params, num_heads)

    # f32 MXU operands: tight numerical check vs reference.
    out_f32 = self_attention_forward(x, params, num_heads, compute_dtype=jnp.float32)
    out_f32 = jax.block_until_ready(out_f32)
    assert out_f32.shape == (batch, seq, dim)
    assert jnp.allclose(out_f32, ref, atol=1e-4, rtol=1e-4), "f32 path mismatch vs reference"

    # bf16 MXU operands (production path per perf review): looser tolerance.
    out_bf16 = self_attention_forward(x, params, num_heads, compute_dtype=jnp.bfloat16)
    out_bf16 = jax.block_until_ready(out_bf16)
    assert jnp.allclose(out_bf16, ref, atol=3e-2, rtol=3e-2), "bf16 path mismatch vs reference"

    print("KERNEL_OK")
</pallas_src>

<mosaic_0001>
module attributes {stable_mosaic.version = 11 : i64} {
  func.func @_self_attention_kernel(%arg0: i32, %arg1: memref<1x8x32xf32, #tpu.memory_space<vmem>>, %arg2: memref<32x96xf32, #tpu.memory_space<vmem>>, %arg3: memref<32x32xf32, #tpu.memory_space<vmem>>, %arg4: memref<1x32xf32, #tpu.memory_space<vmem>>, %arg5: memref<1x8x32xf32, #tpu.memory_space<vmem>>, %arg6: memref<8x32xf32, #tpu.memory_space<vmem>>) attributes {dimension_semantics = [#tpu.dimension_semantics<parallel>], iteration_bounds = array<i64: 2>, scalar_prefetch = 0 : i64, scratch_operands = 1 : i64, tpu.core_type = #tpu.core_type<tc>, window_params = [{transform_indices = @transform_0, window_bounds = array<i64: 1, 8, 32>}, {pipeline_mode = #tpu.pipeline_mode<synchronous>, transform_indices = @transform_1, window_bounds = array<i64: 32, 96>}, {pipeline_mode = #tpu.pipeline_mode<synchronous>, transform_indices = @transform_2, window_bounds = array<i64: 32, 32>}, {pipeline_mode = #tpu.pipeline_mode<synchronous>, transform_indices = @transform_3, window_bounds = array<i64: 1, 32>}, {transform_indices = @transform_4, window_bounds = array<i64: 1, 8, 32>}]} {
    %c0 = arith.constant 0 : index
    %c0_0 = arith.constant 0 : index
    %c0_1 = arith.constant 0 : index
    %0 = vector.load %arg1[%c0, %c0_0, %c0_1] : memref<1x8x32xf32, #tpu.memory_space<vmem>>, vector<1x8x32xf32>
    %1 = vector.shape_cast %0 : vector<1x8x32xf32> to vector<8x32xf32>
    %c0_2 = arith.constant 0 : index
    %c0_3 = arith.constant 0 : index
    %2 = vector.load %arg2[%c0_2, %c0_3] : memref<32x96xf32, #tpu.memory_space<vmem>>, vector<32x96xf32>
    %cst = arith.constant dense<0.000000e+00> : vector<8x96xf32>
    %3 = tpu.matmul %1, %2, %cst {dimension_numbers = #tpu.dot_dimension_numbers<[1], [0], [0], [1], [0, 0, 1, 1], [], []>} : vector<8x32xf32>, vector<32x96xf32>, vector<8x96xf32> -> vector<8x96xf32>
    %4 = vector.extract_strided_slice %3 {offsets = [0, 0], sizes = [8, 4], strides = [1, 1]} : vector<8x96xf32> to vector<8x4xf32>
    %5 = vector.extract_strided_slice %3 {offsets = [0, 32], sizes = [8, 4], strides = [1, 1]} : vector<8x96xf32> to vector<8x4xf32>
    %6 = vector.extract_strided_slice %3 {offsets = [0, 64], sizes = [8, 4], strides = [1, 1]} : vector<8x96xf32> to vector<8x4xf32>
    %cst_4 = arith.constant dense<0.000000e+00> : vector<8x8xf32>
    %7 = tpu.matmul %4, %5, %cst_4 {dimension_numbers = #tpu.dot_dimension_numbers<[1], [1], [0], [0], [0, 0, 1, 0], [], []>} : vector<8x4xf32>, vector<8x4xf32>, vector<8x8xf32> -> vector<8x8xf32>
    %cst_5 = arith.constant 5.000000e-01 : f32
    %8 = vector.broadcast %cst_5 : f32 to vector<8x8xf32>
    %9 = arith.mulf %7, %8 : vector<8x8xf32>
    %cst_6 = arith.constant dense<0xFF800000> : vector<8xf32>
    %10 = vector.multi_reduction <maximumf>, %9, %cst_6 [1] : vector<8x8xf32> to vector<8xf32>
    %11 = vector.shape_cast %10 : vector<8xf32> to vector<8x1xf32>
    %12 = vector.broadcast %11 : vector<8x1xf32> to vector<8x8xf32>
    %13 = arith.subf %9, %12 : vector<8x8xf32>
    %14 = math.exp %13 : vector<8x8xf32>
    %cst_7 = arith.constant dense<0.000000e+00> : vector<8xf32>
    %15 = vector.multi_reduction <add>, %14, %cst_7 [1] : vector<8x8xf32> to vector<8xf32>
    %16 = vector.shape_cast %15 : vector<8xf32> to vector<8x1xf32>
    %17 = vector.broadcast %16 : vector<8x1xf32> to vector<8x8xf32>
    %18 = arith.divf %14, %17 : vector<8x8xf32>
    %cst_8 = arith.constant dense<0.000000e+00> : vector<8x4xf32>
    %19 = tpu.matmul %18, %6, %cst_8 {dimension_numbers = #tpu.dot_dimension_numbers<[1], [0], [0], [1], [0, 0, 1, 1], [], []>} : vector<8x8xf32>, vector<8x4xf32>, vector<8x4xf32> -> vector<8x4xf32>
    %c0_9 = arith.constant 0 : index
    %c0_10 = arith.constant 0 : index
    %20 = vector.load %arg6[%c0_9, %c0_10] : memref<8x32xf32, #tpu.memory_space<vmem>>, vector<8x4xf32>
    tpu.vector_store %arg6[%c0_9, %c0_10], %19 {strides = array<i32>} : memref<8x32xf32, #tpu.memory_space<vmem>>, vector<8x4xf32>,
    %21 = vector.extract_strided_slice %3 {offsets = [0, 4], sizes = [8, 4], strides = [1, 1]} : vector<8x96xf32> to vector<8x4xf32>
    %22 = vector.extract_strided_slice %3 {offsets = [0, 36], sizes = [8, 4], strides = [1, 1]} : vector<8x96xf32> to vector<8x4xf32>
    %23 = vector.extract_strided_slice %3 {offsets = [0, 68], sizes = [8, 4], strides = [1, 1]} : vector<8x96xf32> to vector<8x4xf32>
    %cst_11 = arith.constant dense<0.000000e+00> : vector<8x8xf32>
    %24 = tpu.matmul %21, %22, %cst_11 {dimension_numbers = #tpu.dot_dimension_numbers<[1], [1], [0], [0], [0, 0, 1, 0], [], []>} : vector<8x4xf32>, vector<8x4xf32>, vector<8x8xf32> -> vector<8x8xf32>
    %cst_12 = arith.constant 5.000000e-01 : f32
    %25 = vector.broadcast %cst_12 : f32 to vector<8x8xf32>
    %26 = arith.mulf %24, %25 : vector<8x8xf32>
    %cst_13 = arith.constant dense<0xFF800000> : vector<8xf32>
    %27 = vector.multi_reduction <maximumf>, %26, %cst_13 [1] : vector<8x8xf32> to vector<8xf32>
    %28 = vector.shape_cast %27 : vector<8xf32> to vector<8x1xf32>
    %29 = vector.broadcast %28 : vector<8x1xf32> to vector<8x8xf32>
    %30 = arith.subf %26, %29 : vector<8x8xf32>
    %31 = math.exp %30 : vector<8x8xf32>
    %cst_14 = arith.constant dense<0.000000e+00> : vector<8xf32>
    %32 = vector.multi_reduction <add>, %31, %cst_14 [1] : vector<8x8xf32> to vector<8xf32>
    %33 = vector.shape_cast %32 : vector<8xf32> to vector<8x1xf32>
    %34 = vector.broadcast %33 : vector<8x1xf32> to vector<8x8xf32>
    %35 = arith.divf %31, %34 : vector<8x8xf32>
    %cst_15 = arith.constant dense<0.000000e+00> : vector<8x4xf32>
    %36 = tpu.matmul %35, %23, %cst_15 {dimension_numbers = #tpu.dot_dimension_numbers<[1], [0], [0], [1], [0, 0, 1, 1], [], []>} : vector<8x8xf32>, vector<8x4xf32>, vector<8x4xf32> -> vector<8x4xf32>
    %c0_16 = arith.constant 0 : index
    %c4 = arith.constant 4 : index
    %37 = vector.load %arg6[%c0_16, %c4] : memref<8x32xf32, #tpu.memory_space<vmem>>, vector<8x4xf32>
    tpu.vector_store %arg6[%c0_16, %c4], %36 {strides = array<i32>} : memref<8x32xf32, #tpu.memory_space<vmem>>, vector<8x4xf32>,
    %38 = vector.extract_strided_slice %3 {offsets = [0, 8], sizes = [8, 4], strides = [1, 1]} : vector<8x96xf32> to vector<8x4xf32>
    %39 = vector.extract_strided_slice %3 {offsets = [0, 40], sizes = [8, 4], strides = [1, 1]} : vector<8x96xf32> to vector<8x4xf32>
    %40 = vector.extract_strided_slice %3 {offsets = [0, 72], sizes = [8, 4], strides = [1, 1]} : vector<8x96xf32> to vector<8x4xf32>
    %cst_17 = arith.constant dense<0.000000e+00> : vector<8x8xf32>
    %41 = tpu.matmul %38, %39, %cst_17 {dimension_numbers = #tpu.dot_dimension_numbers<[1], [1], [0], [0], [0, 0, 1, 0], [], []>} : vector<8x4xf32>, vector<8x4xf32>, vector<8x8xf32> -> vector<8x8xf32>
    %cst_18 = arith.constant 5.000000e-01 : f32
    %42 = vector.broadcast %cst_18 : f32 to vector<8x8xf32>
    %43 = arith.mulf %41, %42 : vector<8x8xf32>
    %cst_19 = arith.constant dense<0xFF800000> : vector<8xf32>
    %44 = vector.multi_reduction <maximumf>, %43, %cst_19 [1] : vector<8x8xf32> to vector<8xf32>
    %45 = vector.shape_cast %44 : vector<8xf32> to vector<8x1xf32>
    %46 = vector.broadcast %45 : vector<8x1xf32> to vector<8x8xf32>
    %47 = arith.subf %43, %46 : vector<8x8xf32>
    %48 = math.exp %47 : vector<8x8xf32>
    %cst_20 = arith.constant dense<0.000000e+00> : vector<8xf32>
    %49 = vector.multi_reduction <add>, %48, %cst_20 [1] : vector<8x8xf32> to vector<8xf32>
    %50 = vector.shape_cast %49 : vector<8xf32> to vector<8x1xf32>
    %51 = vector.broadcast %50 : vector<8x1xf32> to vector<8x8xf32>
    %52 = arith.divf %48, %51 : vector<8x8xf32>
    %cst_21 = arith.constant dense<0.000000e+00> : vector<8x4xf32>
    %53 = tpu.matmul %52, %40, %cst_21 {dimension_numbers = #tpu.dot_dimension_numbers<[1], [0], [0], [1], [0, 0, 1, 1], [], []>} : vector<8x8xf32>, vector<8x4xf32>, vector<8x4xf32> -> vector<8x4xf32>
    %c0_22 = arith.constant 0 : index
    %c8 = arith.constant 8 : index
    %54 = vector.load %arg6[%c0_22, %c8] : memref<8x32xf32, #tpu.memory_space<vmem>>, vector<8x4xf32>
    tpu.vector_store %arg6[%c0_22, %c8], %53 {strides = array<i32>} : memref<8x32xf32, #tpu.memory_space<vmem>>, vector<8x4xf32>,
    %55 = vector.extract_strided_slice %3 {offsets = [0, 12], sizes = [8, 4], strides = [1, 1]} : vector<8x96xf32> to vector<8x4xf32>
    %56 = vector.extract_strided_slice %3 {offsets = [0, 44], sizes = [8, 4], strides = [1, 1]} : vector<8x96xf32> to vector<8x4xf32>
    %57 = vector.extract_strided_slice %3 {offsets = [0, 76], sizes = [8, 4], strides = [1, 1]} : vector<8x96xf32> to vector<8x4xf32>
    %cst_23 = arith.constant dense<0.000000e+00> : vector<8x8xf32>
    %58 = tpu.matmul %55, %56, %cst_23 {dimension_numbers = #tpu.dot_dimension_numbers<[1], [1], [0], [0], [0, 0, 1, 0], [], []>} : vector<8x4xf32>, vector<8x4xf32>, vector<8x8xf32> -> vector<8x8xf32>
    %cst_24 = arith.constant 5.000000e-01 : f32
    %59 = vector.broadcast %cst_24 : f32 to vector<8x8xf32>
    %60 = arith.mulf %58, %59 : vector<8x8xf32>
    %cst_25 = arith.constant dense<0xFF800000> : vector<8xf32>
    %61 = vector.multi_reduction <maximumf>, %60, %cst_25 [1] : vector<8x8xf32> to vector<8xf32>
    %62 = vector.shape_cast %61 : vector<8xf32> to vector<8x1xf32>
    %63 = vector.broadcast %62 : vector<8x1xf32> to vector<8x8xf32>
    %64 = arith.subf %60, %63 : vector<8x8xf32>
    %65 = math.exp %64 : vector<8x8xf32>
    %cst_26 = arith.constant dense<0.000000e+00> : vector<8xf32>
    %66 = vector.multi_reduction <add>, %65, %cst_26 [1] : vector<8x8xf32> to vector<8xf32>
    %67 = vector.shape_cast %66 : vector<8xf32> to vector<8x1xf32>
    %68 = vector.broadcast %67 : vector<8x1xf32> to vector<8x8xf32>
    %69 = arith.divf %65, %68 : vector<8x8xf32>
    %cst_27 = arith.constant dense<0.000000e+00> : vector<8x4xf32>
    %70 = tpu.matmul %69, %57, %cst_27 {dimension_numbers = #tpu.dot_dimension_numbers<[1], [0], [0], [1], [0, 0, 1, 1], [], []>} : vector<8x8xf32>, vector<8x4xf32>, vector<8x4xf32> -> vector<8x4xf32>
    %c0_28 = arith.constant 0 : index
    %c12 = arith.constant 12 : index
    %71 = vector.load %arg6[%c0_28, %c12] : memref<8x32xf32, #tpu.memory_space<vmem>>, vector<8x4xf32>
    tpu.vector_store %arg6[%c0_28, %c12], %70 {strides = array<i32>} : memref<8x32xf32, #tpu.memory_space<vmem>>, vector<8x4xf32>,
    %72 = vector.extract_strided_slice %3 {offsets = [0, 16], sizes = [8, 4], strides = [1, 1]} : vector<8x96xf32> to vector<8x4xf32>
    %73 = vector.extract_strided_slice %3 {offsets = [0, 48], sizes = [8, 4], strides = [1, 1]} : vector<8x96xf32> to vector<8x4xf32>
    %74 = vector.extract_strided_slice %3 {offsets = [0, 80], sizes = [8, 4], strides = [1, 1]} : vector<8x96xf32> to vector<8x4xf32>
    %cst_29 = arith.constant dense<0.000000e+00> : vector<8x8xf32>
    %75 = tpu.matmul %72, %73, %cst_29 {dimension_numbers = #tpu.dot_dimension_numbers<[1], [1], [0], [0], [0, 0, 1, 0], [], []>} : vector<8x4xf32>, vector<8x4xf32>, vector<8x8xf32> -> vector<8x8xf32>
    %cst_30 = arith.constant 5.000000e-01 : f32
    %76 = vector.broadcast %cst_30 : f32 to vector<8x8xf32>
    %77 = arith.mulf %75, %76 : vector<8x8xf32>
    %cst_31 = arith.constant dense<0xFF800000> : vector<8xf32>
    %78 = vector.multi_reduction <maximumf>, %77, %cst_31 [1] : vector<8x8xf32> to vector<8xf32>
    %79 = vector.shape_cast %78 : vector<8xf32> to vector<8x1xf32>
    %80 = vector.broadcast %79 : vector<8x1xf32> to vector<8x8xf32>
    %81 = arith.subf %77, %80 : vector<8x8xf32>
    %82 = math.exp %81 : vector<8x8xf32>
    %cst_32 = arith.constant dense<0.000000e+00> : vector<8xf32>
    %83 = vector.multi_reduction <add>, %82, %cst_32 [1] : vector<8x8xf32> to vector<8xf32>
    %84 = vector.shape_cast %83 : vector<8xf32> to vector<8x1xf32>
    %85 = vector.broadcast %84 : vector<8x1xf32> to vector<8x8xf32>
    %86 = arith.divf %82, %85 : vector<8x8xf32>
    %cst_33 = arith.constant dense<0.000000e+00> : vector<8x4xf32>
    %87 = tpu.matmul %86, %74, %cst_33 {dimension_numbers = #tpu.dot_dimension_numbers<[1], [0], [0], [1], [0, 0, 1, 1], [], []>} : vector<8x8xf32>, vector<8x4xf32>, vector<8x4xf32> -> vector<8x4xf32>
    %c0_34 = arith.constant 0 : index
    %c16 = arith.constant 16 : index
    %88 = vector.load %arg6[%c0_34, %c16] : memref<8x32xf32, #tpu.memory_space<vmem>>, vector<8x4xf32>
    tpu.vector_store %arg6[%c0_34, %c16], %87 {strides = array<i32>} : memref<8x32xf32, #tpu.memory_space<vmem>>, vector<8x4xf32>,
    %89 = vector.extract_strided_slice %3 {offsets = [0, 20], sizes = [8, 4], strides = [1, 1]} : vector<8x96xf32> to vector<8x4xf32>
    %90 = vector.extract_strided_slice %3 {offsets = [0, 52], sizes = [8, 4], strides = [1, 1]} : vector<8x96xf32> to vector<8x4xf32>
    %91 = vector.extract_strided_slice %3 {offsets = [0, 84], sizes = [8, 4], strides = [1, 1]} : vector<8x96xf32> to vector<8x4xf32>
    %cst_35 = arith.constant dense<0.000000e+00> : vector<8x8xf32>
    %92 = tpu.matmul %89, %90, %cst_35 {dimension_numbers = #tpu.dot_dimension_numbers<[1], [1], [0], [0], [0, 0, 1, 0], [], []>} : vector<8x4xf32>, vector<8x4xf32>, vector<8x8xf32> -> vector<8x8xf32>
    %cst_36 = arith.constant 5.000000e-01 : f32
    %93 = vector.broadcast %cst_36 : f32 to vector<8x8xf32>
    %94 = arith.mulf %92, %93 : vector<8x8xf32>
    %cst_37 = arith.constant dense<0xFF800000> : vector<8xf32>
    %95 = vector.multi_reduction <maximumf>, %94, %cst_37 [1] : vector<8x8xf32> to vector<8xf32>
    %96 = vector.shape_cast %95 : vector<8xf32> to vector<8x1xf32>
    %97 = vector.broadcast %96 : vector<8x1xf32> to vector<8x8xf32>
    %98 = arith.subf %94, %97 : vector<8x8xf32>
    %99 = math.exp %98 : vector<8x8xf32>
    %cst_38 = arith.constant dense<0.000000e+00> : vector<8xf32>
    %100 = vector.multi_reduction <add>, %99, %cst_38 [1] : vector<8x8xf32> to vector<8xf32>
    %101 = vector.shape_cast %100 : vector<8xf32> to vector<8x1xf32>
    %102 = vector.broadcast %101 : vector<8x1xf32> to vector<8x8xf32>
    %103 = arith.divf %99, %102 : vector<8x8xf32>
    %cst_39 = arith.constant dense<0.000000e+00> : vector<8x4xf32>
    %104 = tpu.matmul %103, %91, %cst_39 {dimension_numbers = #tpu.dot_dimension_numbers<[1], [0], [0], [1], [0, 0, 1, 1], [], []>} : vector<8x8xf32>, vector<8x4xf32>, vector<8x4xf32> -> vector<8x4xf32>
    %c0_40 = arith.constant 0 : index
    %c20 = arith.constant 20 : index
    %105 = vector.load %arg6[%c0_40, %c20] : memref<8x32xf32, #tpu.memory_space<vmem>>, vector<8x4xf32>
    tpu.vector_store %arg6[%c0_40, %c20], %104 {strides = array<i32>} : memref<8x32xf32, #tpu.memory_space<vmem>>, vector<8x4xf32>,
    %106 = vector.extract_strided_slice %3 {offsets = [0, 24], sizes = [8, 4], strides = [1, 1]} : vector<8x96xf32> to vector<8x4xf32>
    %107 = vector.extract_strided_slice %3 {offsets = [0, 56], sizes = [8, 4], strides = [1, 1]} : vector<8x96xf32> to vector<8x4xf32>
    %108 = vector.extract_strided_slice %3 {offsets = [0, 88], sizes = [8, 4], strides = [1, 1]} : vector<8x96xf32> to vector<8x4xf32>
    %cst_41 = arith.constant dense<0.000000e+00> : vector<8x8xf32>
    %109 = tpu.matmul %106, %107, %cst_41 {dimension_numbers = #tpu.dot_dimension_numbers<[1], [1], [0], [0], [0, 0, 1, 0], [], []>} : vector<8x4xf32>, vector<8x4xf32>, vector<8x8xf32> -> vector<8x8xf32>
    %cst_42 = arith.constant 5.000000e-01 : f32
    %110 = vector.broadcast %cst_42 : f32 to vector<8x8xf32>
    %111 = arith.mulf %109, %110 : vector<8x8xf32>
    %cst_43 = arith.constant dense<0xFF800000> : vector<8xf32>
    %112 = vector.multi_reduction <maximumf>, %111, %cst_43 [1] : vector<8x8xf32> to vector<8xf32>
    %113 = vector.shape_cast %112 : vector<8xf32> to vector<8x1xf32>
    %114 = vector.broadcast %113 : vector<8x1xf32> to vector<8x8xf32>
    %115 = arith.subf %111, %114 : vector<8x8xf32>
    %116 = math.exp %115 : vector<8x8xf32>
    %cst_44 = arith.constant dense<0.000000e+00> : vector<8xf32>
    %117 = vector.multi_reduction <add>, %116, %cst_44 [1] : vector<8x8xf32> to vector<8xf32>
    %118 = vector.shape_cast %117 : vector<8xf32> to vector<8x1xf32>
    %119 = vector.broadcast %118 : vector<8x1xf32> to vector<8x8xf32>
    %120 = arith.divf %116, %119 : vector<8x8xf32>
    %cst_45 = arith.constant dense<0.000000e+00> : vector<8x4xf32>
    %121 = tpu.matmul %120, %108, %cst_45 {dimension_numbers = #tpu.dot_dimension_numbers<[1], [0], [0], [1], [0, 0, 1, 1], [], []>} : vector<8x8xf32>, vector<8x4xf32>, vector<8x4xf32> -> vector<8x4xf32>
    %c0_46 = arith.constant 0 : index
    %c24 = arith.constant 24 : index
    %122 = vector.load %arg6[%c0_46, %c24] : memref<8x32xf32, #tpu.memory_space<vmem>>, vector<8x4xf32>
    tpu.vector_store %arg6[%c0_46, %c24], %121 {strides = array<i32>} : memref<8x32xf32, #tpu.memory_space<vmem>>, vector<8x4xf32>,
    %123 = vector.extract_strided_slice %3 {offsets = [0, 28], sizes = [8, 4], strides = [1, 1]} : vector<8x96xf32> to vector<8x4xf32>
    %124 = vector.extract_strided_slice %3 {offsets = [0, 60], sizes = [8, 4], strides = [1, 1]} : vector<8x96xf32> to vector<8x4xf32>
    %125 = vector.extract_strided_slice %3 {offsets = [0, 92], sizes = [8, 4], strides = [1, 1]} : vector<8x96xf32> to vector<8x4xf32>
    %cst_47 = arith.constant dense<0.000000e+00> : vector<8x8xf32>
    %126 = tpu.matmul %123, %124, %cst_47 {dimension_numbers = #tpu.dot_dimension_numbers<[1], [1], [0], [0], [0, 0, 1, 0], [], []>} : vector<8x4xf32>, vector<8x4xf32>, vector<8x8xf32> -> vector<8x8xf32>
    %cst_48 = arith.constant 5.000000e-01 : f32
    %127 = vector.broadcast %cst_48 : f32 to vector<8x8xf32>
    %128 = arith.mulf %126, %127 : vector<8x8xf32>
    %cst_49 = arith.constant dense<0xFF800000> : vector<8xf32>
    %129 = vector.multi_reduction <maximumf>, %128, %cst_49 [1] : vector<8x8xf32> to vector<8xf32>
    %130 = vector.shape_cast %129 : vector<8xf32> to vector<8x1xf32>
    %131 = vector.broadcast %130 : vector<8x1xf32> to vector<8x8xf32>
    %132 = arith.subf %128, %131 : vector<8x8xf32>
    %133 = math.exp %132 : vector<8x8xf32>
    %cst_50 = arith.constant dense<0.000000e+00> : vector<8xf32>
    %134 = vector.multi_reduction <add>, %133, %cst_50 [1] : vector<8x8xf32> to vector<8xf32>
    %135 = vector.shape_cast %134 : vector<8xf32> to vector<8x1xf32>
    %136 = vector.broadcast %135 : vector<8x1xf32> to vector<8x8xf32>
    %137 = arith.divf %133, %136 : vector<8x8xf32>
    %cst_51 = arith.constant dense<0.000000e+00> : vector<8x4xf32>
    %138 = tpu.matmul %137, %125, %cst_51 {dimension_numbers = #tpu.dot_dimension_numbers<[1], [0], [0], [1], [0, 0, 1, 1], [], []>} : vector<8x8xf32>, vector<8x4xf32>, vector<8x4xf32> -> vector<8x4xf32>
    %c0_52 = arith.constant 0 : index
    %c28 = arith.constant 28 : index
    %139 = vector.load %arg6[%c0_52, %c28] : memref<8x32xf32, #tpu.memory_space<vmem>>, vector<8x4xf32>
    tpu.vector_store %arg6[%c0_52, %c28], %138 {strides = array<i32>} : memref<8x32xf32, #tpu.memory_space<vmem>>, vector<8x4xf32>,
    %c0_53 = arith.constant 0 : index
    %c0_54 = arith.constant 0 : index
    %140 = vector.load %arg6[%c0_53, %c0_54] : memref<8x32xf32, #tpu.memory_space<vmem>>, vector<8x32xf32>
    %c0_55 = arith.constant 0 : index
    %c0_56 = arith.constant 0 : index
    %141 = vector.load %arg3[%c0_55, %c0_56] : memref<32x32xf32, #tpu.memory_space<vmem>>, vector<32x32xf32>
    %cst_57 = arith.constant dense<0.000000e+00> : vector<8x32xf32>
    %142 = tpu.matmul %140, %141, %cst_57 {dimension_numbers = #tpu.dot_dimension_numbers<[1], [0], [0], [1], [0, 0, 1, 1], [], []>} : vector<8x32xf32>, vector<32x32xf32>, vector<8x32xf32> -> vector<8x32xf32>
    %c0_58 = arith.constant 0 : index
    %c0_59 = arith.constant 0 : index
    %143 = vector.load %arg4[%c0_58, %c0_59] : memref<1x32xf32, #tpu.memory_space<vmem>>, vector<1x32xf32>
    %144 = vector.broadcast %143 : vector<1x32xf32> to vector<8x32xf32>
    %145 = arith.addf %142, %144 : vector<8x32xf32>
    %c0_60 = arith.constant 0 : index
    %c0_61 = arith.constant 0 : index
    %c0_62 = arith.constant 0 : index
    %146 = vector.load %arg5[%c0_60, %c0_61, %c0_62] : memref<1x8x32xf32, #tpu.memory_space<vmem>>, vector<1x8x32xf32>
    %147 = vector.shape_cast %146 : vector<1x8x32xf32> to vector<8x32xf32>
    %148 = vector.shape_cast %145 : vector<8x32xf32> to vector<1x8x32xf32>
    tpu.vector_store %arg5[%c0_60, %c0_61, %c0_62], %148 {strides = array<i32>} : memref<1x8x32xf32, #tpu.memory_space<vmem>>, vector<1x8x32xf32>,
    return
  }
  func.func @transform_0(%arg0: i32) -> (i32, i32, i32) {
    %c0_i32 = arith.constant 0 : i32
    %c0_i32_0 = arith.constant 0 : i32
    %c0_i32_1 = arith.constant 0 : i32
    return %arg0, %c0_i32, %c0_i32_0 : i32, i32, i32
  }
  func.func @transform_1(%arg0: i32) -> (i32, i32) {
    %c0_i32 = arith.constant 0 : i32
    %c0_i32_0 = arith.constant 0 : i32
    %c0_i32_1 = arith.constant 0 : i32
    return %c0_i32, %c0_i32_0 : i32, i32
  }
  func.func @transform_2(%arg0: i32) -> (i32, i32) {
    %c0_i32 = arith.constant 0 : i32
    %c0_i32_0 = arith.constant 0 : i32
    %c0_i32_1 = arith.constant 0 : i32
    return %c0_i32, %c0_i32_0 : i32, i32
  }
  func.func @transform_3(%arg0: i32) -> (i32, i32) {
    %c0_i32 = arith.constant 0 : i32
    %c0_i32_0 = arith.constant 0 : i32
    %c0_i32_1 = arith.constant 0 : i32
    return %c0_i32, %c0_i32_0 : i32, i32
  }
  func.func @transform_4(%arg0: i32) -> (i32, i32, i32) {
    %c0_i32 = arith.constant 0 : i32
    %c0_i32_0 = arith.constant 0 : i32
    %c0_i32_1 = arith.constant 0 : i32
    return %arg0, %c0_i32, %c0_i32_0 : i32, i32, i32
  }
}

</mosaic_0001>

<llo_original>
// kernel: tpu_custom_call.1
$region0: #{tpu_custom_call.1}
  #allocation0 [shape = 'u32[]', space=smem, size = 0x4, offset = 0x4, fixed_abs, tag = 'smem constant byte address 0x4 - core index']
  #allocation1 [shape = 'u32[72,128]{1,0:T(1,128)}', space=vmem, size = 0x9000, scoped, tag = 'internal scratch']
  #allocation2 [shape = 'f32[8,32]{1,0:T(8,128)}', space=vmem, size = 0x1000, scoped, tag = 'scratch operand']
  %s0 = inlined_call_operand.hbm [shape: f32[2,8,32], index: 0, kind: input, shape index: {}]
  %s1 = inlined_call_operand.hbm [shape: f32[32,96], index: 1, kind: input, shape index: {}]
  %s2 = inlined_call_operand.hbm [shape: f32[32,32], index: 2, kind: input, shape index: {}]
  %s3 = inlined_call_operand.vmem [shape: f32[1,32], index: 3, kind: input, shape index: {}]
  %s4 = inlined_call_operand.hbm [shape: f32[2,8,32], index: 4, kind: output, shape index: {}]
  %s5 = sld [smem:[#allocation0]]
  $region61: #{tpu_custom_call.1} parent=0
    _
  %s7 = ssub.s32 1, %s5
  %s8 = scalar_select 0, %s7, %s5
  $region1: #{tpu_custom_call.1} parent=0
    #allocation3 [shape = 'u8[8192]{0}', space=vmem, size = 0x2000, scoped, tag = 'input window, operand 0']
    #allocation4 [shape = 's32[2]{0}', space=sflag, size = 0x8, scoped, tag = 'scoped memory for tpu_custom_call.1']
    #allocation5 [shape = 's32[2]{0}', space=sflag, size = 0x8, scoped, tag = 'scoped memory for tpu_custom_call.1']
    #allocation6 [shape = 'u8[16384]{0}', space=vmem, size = 0x4000, scoped, tag = 'input window, operand 1, single buffered']
    #allocation7 [shape = 's32[1]{0}', space=sflag, size = 0x4, scoped, tag = 'scoped memory for tpu_custom_call.1']
    #allocation8 [shape = 'u8[16384]{0}', space=vmem, size = 0x4000, scoped, tag = 'input window, operand 2, single buffered']
    #allocation9 [shape = 'u8[8192]{0}', space=vmem, size = 0x2000, scoped, tag = 'output window, operand 0']
    %9 = vsyncpa [#allocation4], 0
    %s10 = scalar_lea.sflag [#allocation4], 1
    %11 = vsyncpa %s10, 0
    %12 = vsyncpa [#allocation7], 0
    %13 = vsyncpa [#allocation5], 0
    %s14 = scalar_lea.sflag [#allocation5], 1
    %15 = vsyncpa %s14, 0
    loop: start=0, step=1, limit=4
    $region2: #{tpu_custom_call.1} parent=1 // loop_pre_header
      _
    $region3: #{tpu_custom_call.1} parent=1 // loop_header
      %s17 = sphi 0, %s21
      %p18 = scmp.ge.s32.totalorder %s17, 4
      %s27 = sphi 0, %s29
      %s30 = sphi 0, %s27
      %s31 = sphi 0, %s30
      %s47 = sphi 0, %s31
      %s51 = sphi 0, %s51
      %s53 = sphi 0, %s51
      %s54 = sphi 0, %s53
      %s68 = sphi 0, %s54
      %s72 = sphi 0, %s72
      %s74 = sphi 0, %s72
      %s75 = sphi 0, %s74
      %s89 = sphi 0, %s75
      %s93 = sphi 0, %s93
      %s95 = sphi 0, %s93
      %s96 = sphi 0, %s95
      %s110 = sphi 0, %s96
      %s116 = sphi 0, %s118
      %s119 = sphi 0, %s116
      %s120 = sphi 0, %s119
      %s136 = sphi 0, %s120
    $region4: #{tpu_custom_call.1} parent=1 // loop_header_branch
      %20 = sbr.rel (%p18) target = $region8
    $region5: #{tpu_custom_call.1} parent=1 // loop_body
      %s22 = ssub.s32 %s17, 1
      %s23 = ssub.s32 %s17, 2
      %s24 = sadd.s32 %s17, 1
      %s25 = ssub.s32 %s17, %s24
      %p26 = scmp.eq.s32.totalorder %s25, 0
      %s28 = sadd.s32 %s27, 1
      %s29 = scalar_select %p26, %s27, %s28
      %p32 = pneg %p26
      %p33 = scmp.eq.s32.totalorder %s17, 1
      %p34 = por %p32, %p33
      %p35 = scmp.ne.s32.totalorder %s27, %s30
      %p36 = scmp.eq.s32.totalorder %s17, 0
      %p37 = por %p35, %p36
      %p38 = scmp.ne.s32.totalorder %s27, %s30
      %p39 = scmp.eq.s32.totalorder %s22, 1
      %p40 = por %p38, %p39
      %p41 = scmp.ne.s32.totalorder %s30, %s31
      %p42 = scmp.eq.s32.totalorder %s22, 0
      %p43 = por %p41, %p42
      %p44 = scmp.ne.s32.totalorder %s30, %s31
      %p45 = scmp.eq.s32.totalorder %s23, 1
      %p46 = por %p44, %p45
      %p48 = scmp.ne.s32.totalorder %s31, %s47
      %p49 = scmp.eq.s32.totalorder %s23, 0
      %p50 = por %p48, %p49
      %s52 = sadd.s32 %s51, 1
      %p55 = scmp.eq.s32.totalorder %s17, 1
      %p56 = scmp.ne.s32.totalorder %s51, %s53
      %p57 = scmp.eq.s32.totalorder %s17, 0
      %p58 = por %p56, %p57
      %p59 = scmp.ne.s32.totalorder %s51, %s53
      %p60 = scmp.eq.s32.totalorder %s22, 1
      %p61 = por %p59, %p60
      %p62 = scmp.ne.s32.totalorder %s53, %s54
      %p63 = scmp.eq.s32.totalorder %s22, 0
      %p64 = por %p62, %p63
      %p65 = scmp.ne.s32.totalorder %s53, %s54
      %p66 = scmp.eq.s32.totalorder %s23, 1
      %p67 = por %p65, %p66
      %p69 = scmp.ne.s32.totalorder %s54, %s68
      %p70 = scmp.eq.s32.totalorder %s23, 0
      %p71 = por %p69, %p70
      %s73 = sadd.s32 %s72, 1
      %p76 = scmp.eq.s32.totalorder %s17, 1
      %p77 = scmp.ne.s32.totalorder %s72, %s74
      %p78 = scmp.eq.s32.totalorder %s17, 0
      %p79 = por %p77, %p78
      %p80 = scmp.ne.s32.totalorder %s72, %s74
      %p81 = scmp.eq.s32.totalorder %s22, 1
      %p82 = por %p80, %p81
      %p83 = scmp.ne.s32.totalorder %s74, %s75
      %p84 = scmp.eq.s32.totalorder %s22, 0
      %p85 = por %p83, %p84
      %p86 = scmp.ne.s32.totalorder %s74, %s75
      %p87 = scmp.eq.s32.totalorder %s23, 1
      %p88 = por %p86, %p87
      %p90 = scmp.ne.s32.totalorder %s75, %s89
      %p91 = scmp.eq.s32.totalorder %s23, 0
      %p92 = por %p90, %p91
      %s94 = sadd.s32 %s93, 1
      %p97 = scmp.eq.s32.totalorder %s17, 1
      %p98 = scmp.ne.s32.totalorder %s93, %s95
      %p99 = scmp.eq.s32.totalorder %s17, 0
      %p100 = por %p98, %p99
      %p101 = scmp.ne.s32.totalorder %s93, %s95
      %p102 = scmp.eq.s32.totalorder %s22, 1
      %p103 = por %p101, %p102
      %p104 = scmp.ne.s32.totalorder %s95, %s96
      %p105 = scmp.eq.s32.totalorder %s22, 0
      %p106 = por %p104, %p105
      %p107 = scmp.ne.s32.totalorder %s95, %s96
      %p108 = scmp.eq.s32.totalorder %s23, 1
      %p109 = por %p107, %p108
      %p111 = scmp.ne.s32.totalorder %s96, %s110
      %p112 = scmp.eq.s32.totalorder %s23, 0
      %p113 = por %p111, %p112
      %s114 = ssub.s32 %s17, %s24
      %p115 = scmp.eq.s32.totalorder %s114, 0
      %s117 = sadd.s32 %s116, 1
      %s118 = scalar_select %p115, %s116, %s117
      %p121 = pneg %p115
      %p122 = scmp.eq.s32.totalorder %s17, 1
      %p123 = por %p121, %p122
      %p124 = scmp.ne.s32.totalorder %s116, %s119
      %p125 = scmp.eq.s32.totalorder %s17, 0
      %p126 = por %p124, %p125
      %p127 = scmp.ne.s32.totalorder %s116, %s119
      %p128 = scmp.eq.s32.totalorder %s22, 1
      %p129 = por %p127, %p128
      %p130 = scmp.ne.s32.totalorder %s119, %s120
      %p131 = scmp.eq.s32.totalorder %s22, 0
      %p132 = por %p130, %p131
      %p133 = scmp.ne.s32.totalorder %s119, %s120
      %p134 = scmp.eq.s32.totalorder %s23, 1
      %p135 = por %p133, %p134
      %p137 = scmp.ne.s32.totalorder %s120, %s136
      %p138 = scmp.eq.s32.totalorder %s23, 0
      %p139 = por %p137, %p138
      %p140 = scmp.le.s32.totalorder 1, %s17
      %p141 = scmp.lt.s32.totalorder %s17, 3
      %p142 = pnand %p140, %p141
      %p143 = pneg %p142
      // Predicated region
      $region9: #{tpu_custom_call.1} parent=5 // pred_check
        _
      $region10: #{tpu_custom_call.1} parent=5 // pred_check_branch
        %145 = sbr.rel (%p142) target = $region12
      $region11: #{tpu_custom_call.1} parent=5 // pred_region
        %s146 = ssub.s32 %s17, 1
        // Predicated region
        $region13: #{tpu_custom_call.1} parent=11 // pred_check
          %p147 = pneg %p64
        $region14: #{tpu_custom_call.1} parent=11 // pred_check_branch
          %149 = sbr.rel (%p147) target = $region16
        $region15: #{tpu_custom_call.1} parent=11 // pred_region
          %151 = vsyncadd [#allocation7], 0
          %s152 = sshll.u32 %s1, 4
          %s153 = int_to_ptr.hbm [resolvable:$true] %s152
          %s154 = sshll.u32 [#allocation6], 4
          %s155 = int_to_ptr.vmem [resolvable:$true] %s154
          %160 = dma.hbm_to_vmem [thread:$0]  %s153, 512, %s155, [#allocation7], 128, 128, 8
        $region16: #{tpu_custom_call.1} parent=11 // pred_fallthru
          _
        // Predicated region
        $region17: #{tpu_custom_call.1} parent=11 // pred_check
          %p161 = pneg %p85
        $region18: #{tpu_custom_call.1} parent=11 // pred_check_branch
          %163 = sbr.rel (%p161) target = $region20
        $region19: #{tpu_custom_call.1} parent=11 // pred_region
          %165 = vsyncadd [#allocation7], 0
          %s166 = sshll.u32 %s2, 4
          %s167 = int_to_ptr.hbm [resolvable:$true] %s166
          %s168 = sshll.u32 [#allocation8], 4
          %s169 = int_to_ptr.vmem [resolvable:$true] %s168
          %174 = dma.hbm_to_vmem [thread:$0]  %s167, 512, %s169, [#allocation7], 128, 128, 8
        $region20: #{tpu_custom_call.1} parent=11 // pred_fallthru
          _
        // Predicated region
        $region21: #{tpu_custom_call.1} parent=11 // pred_check
          %p175 = pneg %p106
        $region22: #{tpu_custom_call.1} parent=11 // pred_check_branch
          %177 = sbr.rel (%p175) target = $region24
        $region23: #{tpu_custom_call.1} parent=11 // pred_region
          _
        $region24: #{tpu_custom_call.1} parent=11 // pred_fallthru
          _
      $region12: #{tpu_custom_call.1} parent=5 // pred_fallthru
        _
      %p178 = scmp.lt.s32.totalorder %s17, 2
      // Predicated region
      $region25: #{tpu_custom_call.1} parent=5 // pred_check
        %p179 = pneg %p178
      $region26: #{tpu_custom_call.1} parent=5 // pred_check_branch
        %181 = sbr.rel (%p179) target = $region28
      $region27: #{tpu_custom_call.1} parent=5 // pred_region
        // Predicated region
        $region29: #{tpu_custom_call.1} parent=27 // pred_check
          %p182 = pneg %p37
        $region30: #{tpu_custom_call.1} parent=27 // pred_check_branch
          %184 = sbr.rel (%p182) target = $region32
        $region31: #{tpu_custom_call.1} parent=27 // pred_region
          %s185 = sand.u32 %s27, 1
          %s186 = scalar_lea.sflag [#allocation4], %s185
          %s187 = sand.u32 %s27, 1
          %s188 = smul.addr %s187, 8
          %s189 = scalar_lea.vmem [#allocation3], %s188
          %191 = vsyncadd %s186, 0
          %s192 = smul.addr %s17, 8
          %s193 = scalar_lea.hbm %s0, %s192
          %s195 = sshll.u32 %s193, 4
          %s196 = int_to_ptr.hbm [resolvable:$true] %s195
          %s197 = sshll.u32 %s189, 4
          %s198 = int_to_ptr.vmem [resolvable:$true] %s197
          %200 = dma.hbm_to_vmem [thread:$0]  %s196, 128, %s198, %s186
        $region32: #{tpu_custom_call.1} parent=27 // pred_fallthru
          _
      $region28: #{tpu_custom_call.1} parent=5 // pred_fallthru
        _
      %p201 = scmp.le.s32.totalorder 1, %s17
      %p202 = scmp.lt.s32.totalorder %s17, 3
      %p203 = pnand %p201, %p202
      %p204 = pneg %p203
      // Predicated region
      $region33: #{tpu_custom_call.1} parent=5 // pred_check
        _
      $region34: #{tpu_custom_call.1} parent=5 // pred_check_branch
        %206 = sbr.rel (%p203) target = $region36
      $region35: #{tpu_custom_call.1} parent=5 // pred_region
        %s207 = ssub.s32 %s17, 1
        %s208 = sand.u32 %s30, 1
        %s209 = scalar_lea.sflag [#allocation4], %s208
        %s210 = sand.u32 %s30, 1
        %s211 = smul.addr %s210, 8
        %s212 = scalar_lea.vmem [#allocation3], %s211
        // Predicated region
        $region37: #{tpu_custom_call.1} parent=35 // pred_check
          %p213 = pneg %p43
        $region38: #{tpu_custom_call.1} parent=35 // pred_check_branch
          %215 = sbr.rel (%p213) target = $region40
        $region39: #{tpu_custom_call.1} parent=35 // pred_region
          %217 = dma.done %s209, 128
        $region40: #{tpu_custom_call.1} parent=35 // pred_fallthru
          _
        // Predicated region
        $region41: #{tpu_custom_call.1} parent=35 // pred_check
          %p218 = pneg %p64
        $region42: #{tpu_custom_call.1} parent=35 // pred_check_branch
          %220 = sbr.rel (%p218) target = $region44
        $region43: #{tpu_custom_call.1} parent=35 // pred_region
          %222 = dma.done [#allocation7], 512
        $region44: #{tpu_custom_call.1} parent=35 // pred_fallthru
          _
        // Predicated region
        $region45: #{tpu_custom_call.1} parent=35 // pred_check
          %p223 = pneg %p85
        $region46: #{tpu_custom_call.1} parent=35 // pred_check_branch
          %225 = sbr.rel (%p223) target = $region48
        $region47: #{tpu_custom_call.1} parent=35 // pred_region
          %227 = dma.done [#allocation7], 512
        $region48: #{tpu_custom_call.1} parent=35 // pred_fallthru
          _
        %s228 = sand.u32 %s30, 1
        %s229 = scalar_lea.sflag [#allocation4], %s228
        %s230 = sand.u32 %s30, 1
        %s231 = smul.addr %s230, 8
        %s232 = scalar_lea.vmem [#allocation3], %s231
        %p233 = pneg %p43
        %p234 = pneg %p40
        %p235 = pneg %p64
        %p236 = pneg %p61
        %p237 = pneg %p85
        %p238 = pneg %p82
        %p239 = pneg %p106
        %p240 = pneg %p103
        %p241 = pneg %p132
        %p242 = pneg %p129
        %s243 = sand.u32 %s119, 1
        %s244 = scalar_lea.sflag [#allocation5], %s243
        %s245 = sand.u32 %s119, 1
        %s246 = smul.addr %s245, 8
        %s247 = scalar_lea.vmem [#allocation9], %s246
        %v248 = vld [vmem:[%s212] sm:$0xff]
        %v249 = vld [vmem:[#allocation6] sm:$0xff]
        %v250 = vld [vmem:[#allocation6 + $0x8] sm:$0xff]
        %v251 = vld [vmem:[#allocation6 + $0x10] sm:$0xff]
        %v252 = vld [vmem:[#allocation6 + $0x18] sm:$0xff]
        %vm253 = vcmask 261120
        %v255 = vsel %vm253, %v248, 0
        %257 = vmatpush.msra.mxu0 0.0
        %258 = vmatpush.msra.mxu0 0.0
        %259 = vmatpush.msra.mxu0 0.0
        %260 = vmatpush.msra.mxu0 0.0
        %261 = vmatpush.msra.mxu0 0.0
        %262 = vmatpush.msra.mxu0 0.0
        %263 = vmatpush.msra.mxu0 0.0
        %264 = vmatpush.msra.mxu0 0.0
        %265 = vmatpush.msra.mxu0 0.0
        %266 = vmatpush.msra.mxu0 0.0
        %267 = vmatpush.msra.mxu0 0.0
        %268 = vmatpush.msra.mxu0 0.0
        %269 = vmatpush.msra.mxu0 %v252
        %270 = vmatpush.msra.mxu0 %v251
        %271 = vmatpush.msra.mxu0 %v250
        %272 = vmatpush.msra.mxu0 %v249
        %273 = vmatmul.f32.gmra.mxu0 %v255
        %v274 = vpop.f32.mrf.mxu0
        %v275 = vadd.f32 0.0, %v274
        %276 = vdwg.mxu0
        %278 = vrot.lane.b32.xlu0 %v275, 96
        %v279 = vpop.permute.xlu0 %278
        %vm280 = vcmask 31744
        %v281 = vsel %vm280, %v275, 0
        %v283 = vsel %vm280, %v279, 0
        %285 = vmatpush.xpose.msra.mxu0 0.0
        %286 = vmatpush.xpose.msra.mxu0 0.0
        %287 = vmatpush.xpose.msra.mxu0 0.0
        %288 = vmatpush.xpose.msra.mxu0 0.0
        %289 = vmatpush.xpose.msra.mxu0 0.0
        %290 = vmatpush.xpose.msra.mxu0 0.0
        %291 = vmatpush.xpose.msra.mxu0 0.0
        %292 = vmatpush.xpose.msra.mxu0 0.0
        %293 = vmatpush.xpose.msra.mxu0 0.0
        %294 = vmatpush.xpose.msra.mxu0 0.0
        %295 = vmatpush.xpose.msra.mxu0 0.0
        %296 = vmatpush.xpose.msra.mxu0 0.0
        %297 = vmatpush.xpose.msra.mxu0 0.0
        %298 = vmatpush.xpose.msra.mxu0 0.0
        %299 = vmatpush.xpose.msra.mxu0 0.0
        %300 = vmatpush.xpose.msra.mxu0 %v283
        %301 = vmatmul.f32.gmra.mxu0 %v281
        %v302 = vpop.f32.mrf.mxu0
        %v303 = vadd.f32 0.0, %v302
        %304 = vdwg.mxu0
        %v305 = vmul.f32 %v303, 0.5
        %vm306 = vcmask 64512
        %v307 = vsel %vm306, %v305, -inf
        %308 = vmax.xlane.f32.xlu0 %v307
        %v309 = vpop.xlane.xlu0 %308
        %v310 = vsub.f32 %v305, %v309
        %v311 = vmul.f32 %v310, 1.442695
        %v312 = vpow.pop %v311
        %v313 = vsel %vm306, %v312, 0.0
        %314 = vadd.xlane.f32.xlu0 %v313
        %v315 = vpop.xlane.xlu0 %314
        %v316 = vrcp.pop %v315
        %v317 = vmul.f32 %v315, %v316
        %v318 = vsub.f32 1.0, %v317
        %v319 = vmul.f32 %v316, %v318
        %v320 = vadd.f32 %v316, %v319
        %vm321 = vweird.f32 %v315
        %vm322 = vweird.f32 %v316
        %vm323 = vmor %vm321, %vm322
        %v324 = vsel %vm323, %v316, %v320
        %v325 = vand.u32 2147483647, %v315
        %vm326 = vcmp.eq.f32.partialorder %v325, 8.507059e+37
        %v327 = vand.u32 %v315, 2147483648
        %v328 = vor.u32 1.1754944e-38, %v327
        %v329 = vsel %vm326, %v328, %v324
        %v330 = vmul.f32 %v312, %v329
        %331 = vrot.lane.b32.xlu0 %v275, 64
        %v332 = vpop.permute.xlu0 %331
        %v335 = vsel %vm306, %v330, 0
        %337 = vmatpush.msra.mxu0 0.0
        %338 = vmatpush.msra.mxu0 0.0
        %339 = vmatpush.msra.mxu0 0.0
        %340 = vmatpush.msra.mxu0 0.0
        %341 = vmatpush.msra.mxu0 0.0
        %342 = vmatpush.msra.mxu0 0.0
        %343 = vmatpush.msra.mxu0 0.0
        %344 = vmatpush.msra.mxu0 0.0
        %345 = vmatpush.msra.mxu0 0.0
        %346 = vmatpush.msra.mxu0 0.0
        %347 = vmatpush.msra.mxu0 0.0
        %348 = vmatpush.msra.mxu0 0.0
        %349 = vmatpush.msra.mxu0 0.0
        %350 = vmatpush.msra.mxu0 0.0
        %351 = vmatpush.msra.mxu0 0.0
        %352 = vmatpush.msra.mxu0 %v332
        %353 = vmatmul.f32.gmra.mxu0 %v335
        %v354 = vpop.f32.mrf.mxu0
        %v355 = vadd.f32 0.0, %v354
        %356 = vdwg.mxu0
        %357 = vst.msk [vmem:[#allocation2] sm:$0xff] %vm280, %v355
        %358 = vrot.lane.b32.xlu0 %v275, 124
        %v359 = vpop.permute.xlu0 %358
        %360 = vrot.lane.b32.xlu0 %v275, 92
        %v361 = vpop.permute.xlu0 %360
        %v362 = vsel %vm280, %v359, 0
        %v364 = vsel %vm280, %v361, 0
        %366 = vmatpush.xpose.msra.mxu0 0.0
        %367 = vmatpush.xpose.msra.mxu0 0.0
        %368 = vmatpush.xpose.msra.mxu0 0.0
        %369 = vmatpush.xpose.msra.mxu0 0.0
        %370 = vmatpush.xpose.msra.mxu0 0.0
        %371 = vmatpush.xpose.msra.mxu0 0.0
        %372 = vmatpush.xpose.msra.mxu0 0.0
        %373 = vmatpush.xpose.msra.mxu0 0.0
        %374 = vmatpush.xpose.msra.mxu0 0.0
        %375 = vmatpush.xpose.msra.mxu0 0.0
        %376 = vmatpush.xpose.msra.mxu0 0.0
        %377 = vmatpush.xpose.msra.mxu0 0.0
        %378 = vmatpush.xpose.msra.mxu0 0.0
        %379 = vmatpush.xpose.msra.mxu0 0.0
        %380 = vmatpush.xpose.msra.mxu0 0.0
        %381 = vmatpush.xpose.msra.mxu0 %v364
        %382 = vmatmul.f32.gmra.mxu0 %v362
        %v383 = vpop.f32.mrf.mxu0
        %v384 = vadd.f32 0.0, %v383
        %385 = vdwg.mxu0
        %v386 = vmul.f32 %v384, 0.5
        %v387 = vsel %vm306, %v386, -inf
        %388 = vmax.xlane.f32.xlu0 %v387
        %v389 = vpop.xlane.xlu0 %388
        %v390 = vsub.f32 %v386, %v389
        %v391 = vmul.f32 %v390, 1.442695
        %v392 = vpow.pop %v391
        %v393 = vsel %vm306, %v392, 0.0
        %394 = vadd.xlane.f32.xlu0 %v393
        %v395 = vpop.xlane.xlu0 %394
        %v396 = vrcp.pop %v395
        %v397 = vmul.f32 %v395, %v396
        %v398 = vsub.f32 1.0, %v397
        %v399 = vmul.f32 %v396, %v398
        %v400 = vadd.f32 %v396, %v399
        %vm401 = vweird.f32 %v395
        %vm402 = vweird.f32 %v396
        %vm403 = vmor %vm401, %vm402
        %v404 = vsel %vm403, %v396, %v400
        %v405 = vand.u32 2147483647, %v395
        %vm406 = vcmp.eq.f32.partialorder %v405, 8.507059e+37
        %v407 = vand.u32 %v395, 2147483648
        %v408 = vor.u32 1.1754944e-38, %v407
        %v409 = vsel %vm406, %v408, %v404
        %v410 = vmul.f32 %v392, %v409
        %411 = vrot.lane.b32.xlu0 %v275, 60
        %v412 = vpop.permute.xlu0 %411
        %v415 = vsel %vm306, %v410, 0
        %417 = vmatpush.msra.mxu0 0.0
        %418 = vmatpush.msra.mxu0 0.0
        %419 = vmatpush.msra.mxu0 0.0
        %420 = vmatpush.msra.mxu0 0.0
        %421 = vmatpush.msra.mxu0 0.0
        %422 = vmatpush.msra.mxu0 0.0
        %423 = vmatpush.msra.mxu0 0.0
        %424 = vmatpush.msra.mxu0 0.0
        %425 = vmatpush.msra.mxu0 0.0
        %426 = vmatpush.msra.mxu0 0.0
        %427 = vmatpush.msra.mxu0 0.0
        %428 = vmatpush.msra.mxu0 0.0
        %429 = vmatpush.msra.mxu0 0.0
        %430 = vmatpush.msra.mxu0 0.0
        %431 = vmatpush.msra.mxu0 0.0
        %432 = vmatpush.msra.mxu0 %v412
        %433 = vmatmul.f32.gmra.mxu0 %v415
        %v434 = vpop.f32.mrf.mxu0
        %v435 = vadd.f32 0.0, %v434
        %436 = vdwg.mxu0
        %438 = vrot.lane.b32.xlu0 %v435, 4
        %v439 = vpop.permute.xlu0 %438
        %vm441 = vcmask 64544
        %442 = vst.msk [vmem:[#allocation2] sm:$0xff] %vm441, %v439
        %443 = vrot.lane.b32.xlu0 %v275, 120
        %v444 = vpop.permute.xlu0 %443
        %445 = vrot.lane.b32.xlu0 %v275, 88
        %v446 = vpop.permute.xlu0 %445
        %v447 = vsel %vm280, %v444, 0
        %v449 = vsel %vm280, %v446, 0
        %451 = vmatpush.xpose.msra.mxu0 0.0
        %452 = vmatpush.xpose.msra.mxu0 0.0
        %453 = vmatpush.xpose.msra.mxu0 0.0
        %454 = vmatpush.xpose.msra.mxu0 0.0
        %455 = vmatpush.xpose.msra.mxu0 0.0
        %456 = vmatpush.xpose.msra.mxu0 0.0
        %457 = vmatpush.xpose.msra.mxu0 0.0
        %458 = vmatpush.xpose.msra.mxu0 0.0
        %459 = vmatpush.xpose.msra.mxu0 0.0
        %460 = vmatpush.xpose.msra.mxu0 0.0
        %461 = vmatpush.xpose.msra.mxu0 0.0
        %462 = vmatpush.xpose.msra.mxu0 0.0
        %463 = vmatpush.xpose.msra.mxu0 0.0
        %464 = vmatpush.xpose.msra.mxu0 0.0
        %465 = vmatpush.xpose.msra.mxu0 0.0
        %466 = vmatpush.xpose.msra.mxu0 %v449
        %467 = vmatmul.f32.gmra.mxu0 %v447
        %v468 = vpop.f32.mrf.mxu0
        %v469 = vadd.f32 0.0, %v468
        %470 = vdwg.mxu0
        %v471 = vmul.f32 %v469, 0.5
        %v472 = vsel %vm306, %v471, -inf
        %473 = vmax.xlane.f32.xlu0 %v472
        %v474 = vpop.xlane.xlu0 %473
        %v475 = vsub.f32 %v471, %v474
        %v476 = vmul.f32 %v475, 1.442695
        %v477 = vpow.pop %v476
        %v478 = vsel %vm306, %v477, 0.0
        %479 = vadd.xlane.f32.xlu0 %v478
        %v480 = vpop.xlane.xlu0 %479
        %v481 = vrcp.pop %v480
        %v482 = vmul.f32 %v480, %v481
        %v483 = vsub.f32 1.0, %v482
        %v484 = vmul.f32 %v481, %v483
        %v485 = vadd.f32 %v481, %v484
        %vm486 = vweird.f32 %v480
        %vm487 = vweird.f32 %v481
        %vm488 = vmor %vm486, %vm487
        %v489 = vsel %vm488, %v481, %v485
        %v490 = vand.u32 2147483647, %v480
        %vm491 = vcmp.eq.f32.partialorder %v490, 8.507059e+37
        %v492 = vand.u32 %v480, 2147483648
        %v493 = vor.u32 1.1754944e-38, %v492
        %v494 = vsel %vm491, %v493, %v489
        %v495 = vmul.f32 %v477, %v494
        %496 = vrot.lane.b32.xlu0 %v275, 56
        %v497 = vpop.permute.xlu0 %496
        %v500 = vsel %vm306, %v495, 0
        %502 = vmatpush.msra.mxu0 0.0
        %503 = vmatpush.msra.mxu0 0.0
        %504 = vmatpush.msra.mxu0 0.0
        %505 = vmatpush.msra.mxu0 0.0
        %506 = vmatpush.msra.mxu0 0.0
        %507 = vmatpush.msra.mxu0 0.0
        %508 = vmatpush.msra.mxu0 0.0
        %509 = vmatpush.msra.mxu0 0.0
        %510 = vmatpush.msra.mxu0 0.0
        %511 = vmatpush.msra.mxu0 0.0
        %512 = vmatpush.msra.mxu0 0.0
        %513 = vmatpush.msra.mxu0 0.0
        %514 = vmatpush.msra.mxu0 0.0
        %515 = vmatpush.msra.mxu0 0.0
        %516 = vmatpush.msra.mxu0 0.0
        %517 = vmatpush.msra.mxu0 %v497
        %518 = vmatmul.f32.gmra.mxu0 %v500
        %v519 = vpop.f32.mrf.mxu0
        %v520 = vadd.f32 0.0, %v519
        %521 = vdwg.mxu0
        %523 = vrot.lane.b32.xlu0 %v520, 8
        %v524 = vpop.permute.xlu0 %523
        %vm526 = vcmask 97344
        %527 = vst.msk [vmem:[#allocation2] sm:$0xff] %vm526, %v524
        %528 = vrot.lane.b32.xlu0 %v275, 116
        %v529 = vpop.permute.xlu0 %528
        %530 = vrot.lane.b32.xlu0 %v275, 84
        %v531 = vpop.permute.xlu0 %530
        %v532 = vsel %vm280, %v529, 0
        %v534 = vsel %vm280, %v531, 0
        %536 = vmatpush.xpose.msra.mxu0 0.0
        %537 = vmatpush.xpose.msra.mxu0 0.0
        %538 = vmatpush.xpose.msra.mxu0 0.0
        %539 = vmatpush.xpose.msra.mxu0 0.0
        %540 = vmatpush.xpose.msra.mxu0 0.0
        %541 = vmatpush.xpose.msra.mxu0 0.0
        %542 = vmatpush.xpose.msra.mxu0 0.0
        %543 = vmatpush.xpose.msra.mxu0 0.0
        %544 = vmatpush.xpose.msra.mxu0 0.0
        %545 = vmatpush.xpose.msra.mxu0 0.0
        %546 = vmatpush.xpose.msra.mxu0 0.0
        %547 = vmatpush.xpose.msra.mxu0 0.0
        %548 = vmatpush.xpose.msra.mxu0 0.0
        %549 = vmatpush.xpose.msra.mxu0 0.0
        %550 = vmatpush.xpose.msra.mxu0 0.0
        %551 = vmatpush.xpose.msra.mxu0 %v534
        %552 = vmatmul.f32.gmra.mxu0 %v532
        %v553 = vpop.f32.mrf.mxu0
        %v554 = vadd.f32 0.0, %v553
        %555 = vdwg.mxu0
        %v556 = vmul.f32 %v554, 0.5
        %v557 = vsel %vm306, %v556, -inf
        %558 = vmax.xlane.f32.xlu0 %v557
        %v559 = vpop.xlane.xlu0 %558
        %v560 = vsub.f32 %v556, %v559
        %v561 = vmul.f32 %v560, 1.442695
        %v562 = vpow.pop %v561
        %v563 = vsel %vm306, %v562, 0.0
        %564 = vadd.xlane.f32.xlu0 %v563
        %v565 = vpop.xlane.xlu0 %564
        %v566 = vrcp.pop %v565
        %v567 = vmul.f32 %v565, %v566
        %v568 = vsub.f32 1.0, %v567
        %v569 = vmul.f32 %v566, %v568
        %v570 = vadd.f32 %v566, %v569
        %vm571 = vweird.f32 %v565
        %vm572 = vweird.f32 %v566
        %vm573 = vmor %vm571, %vm572
        %v574 = vsel %vm573, %v566, %v570
        %v575 = vand.u32 2147483647, %v565
        %vm576 = vcmp.eq.f32.partialorder %v575, 8.507059e+37
        %v577 = vand.u32 %v565, 2147483648
        %v578 = vor.u32 1.1754944e-38, %v577
        %v579 = vsel %vm576, %v578, %v574
        %v580 = vmul.f32 %v562, %v579
        %581 = vrot.lane.b32.xlu0 %v275, 52
        %v582 = vpop.permute.xlu0 %581
        %v585 = vsel %vm306, %v580, 0
        %587 = vmatpush.msra.mxu0 0.0
        %588 = vmatpush.msra.mxu0 0.0
        %589 = vmatpush.msra.mxu0 0.0
        %590 = vmatpush.msra.mxu0 0.0
        %591 = vmatpush.msra.mxu0 0.0
        %592 = vmatpush.msra.mxu0 0.0
        %593 = vmatpush.msra.mxu0 0.0
        %594 = vmatpush.msra.mxu0 0.0
        %595 = vmatpush.msra.mxu0 0.0
        %596 = vmatpush.msra.mxu0 0.0
        %597 = vmatpush.msra.mxu0 0.0
        %598 = vmatpush.msra.mxu0 0.0
        %599 = vmatpush.msra.mxu0 0.0
        %600 = vmatpush.msra.mxu0 0.0
        %601 = vmatpush.msra.mxu0 0.0
        %602 = vmatpush.msra.mxu0 %v582
        %603 = vmatmul.f32.gmra.mxu0 %v585
        %v604 = vpop.f32.mrf.mxu0
        %v605 = vadd.f32 0.0, %v604
        %606 = vdwg.mxu0
        %608 = vrot.lane.b32.xlu0 %v605, 12
        %v609 = vpop.permute.xlu0 %608
        %vm611 = vcmask 130144
        %612 = vst.msk [vmem:[#allocation2] sm:$0xff] %vm611, %v609
        %613 = vrot.lane.b32.xlu0 %v275, 112
        %v614 = vpop.permute.xlu0 %613
        %615 = vrot.lane.b32.xlu0 %v275, 80
        %v616 = vpop.permute.xlu0 %615
        %v617 = vsel %vm280, %v614, 0
        %v619 = vsel %vm280, %v616, 0
        %621 = vmatpush.xpose.msra.mxu0 0.0
        %622 = vmatpush.xpose.msra.mxu0 0.0
        %623 = vmatpush.xpose.msra.mxu0 0.0
        %624 = vmatpush.xpose.msra.mxu0 0.0
        %625 = vmatpush.xpose.msra.mxu0 0.0
        %626 = vmatpush.xpose.msra.mxu0 0.0
        %627 = vmatpush.xpose.msra.mxu0 0.0
        %628 = vmatpush.xpose.msra.mxu0 0.0
        %629 = vmatpush.xpose.msra.mxu0 0.0
        %630 = vmatpush.xpose.msra.mxu0 0.0
        %631 = vmatpush.xpose.msra.mxu0 0.0
        %632 = vmatpush.xpose.msra.mxu0 0.0
        %633 = vmatpush.xpose.msra.mxu0 0.0
        %634 = vmatpush.xpose.msra.mxu0 0.0
        %635 = vmatpush.xpose.msra.mxu0 0.0
        %636 = vmatpush.xpose.msra.mxu0 %v619
        %637 = vmatmul.f32.gmra.mxu0 %v617
        %v638 = vpop.f32.mrf.mxu0
        %v639 = vadd.f32 0.0, %v638
        %640 = vdwg.mxu0
        %v641 = vmul.f32 %v639, 0.5
        %v642 = vsel %vm306, %v641, -inf
        %643 = vmax.xlane.f32.xlu0 %v642
        %v644 = vpop.xlane.xlu0 %643
        %v645 = vsub.f32 %v641, %v644
        %v646 = vmul.f32 %v645, 1.442695
        %v647 = vpow.pop %v646
        %v648 = vsel %vm306, %v647, 0.0
        %649 = vadd.xlane.f32.xlu0 %v648
        %v650 = vpop.xlane.xlu0 %649
        %v651 = vrcp.pop %v650
        %v652 = vmul.f32 %v650, %v651
        %v653 = vsub.f32 1.0, %v652
        %v654 = vmul.f32 %v651, %v653
        %v655 = vadd.f32 %v651, %v654
        %vm656 = vweird.f32 %v650
        %vm657 = vweird.f32 %v651
        %vm658 = vmor %vm656, %vm657
        %v659 = vsel %vm658, %v651, %v655
        %v660 = vand.u32 2147483647, %v650
        %vm661 = vcmp.eq.f32.partialorder %v660, 8.507059e+37
        %v662 = vand.u32 %v650, 2147483648
        %v663 = vor.u32 1.1754944e-38, %v662
        %v664 = vsel %vm661, %v663, %v659
        %v665 = vmul.f32 %v647, %v664
        %666 = vrot.lane.b32.xlu0 %v275, 48
        %v667 = vpop.permute.xlu0 %666
        %v670 = vsel %vm306, %v665, 0
        %672 = vmatpush.msra.mxu0 0.0
        %673 = vmatpush.msra.mxu0 0.0
        %674 = vmatpush.msra.mxu0 0.0
        %675 = vmatpush.msra.mxu0 0.0
        %676 = vmatpush.msra.mxu0 0.0
        %677 = vmatpush.msra.mxu0 0.0
        %678 = vmatpush.msra.mxu0 0.0
        %679 = vmatpush.msra.mxu0 0.0
        %680 = vmatpush.msra.mxu0 0.0
        %681 = vmatpush.msra.mxu0 0.0
        %682 = vmatpush.msra.mxu0 0.0
        %683 = vmatpush.msra.mxu0 0.0
        %684 = vmatpush.msra.mxu0 0.0
        %685 = vmatpush.msra.mxu0 0.0
        %686 = vmatpush.msra.mxu0 0.0
        %687 = vmatpush.msra.mxu0 %v667
        %688 = vmatmul.f32.gmra.mxu0 %v670
        %v689 = vpop.f32.mrf.mxu0
        %v690 = vadd.f32 0.0, %v689
        %691 = vdwg.mxu0
        %693 = vrot.lane.b32.xlu0 %v690, 16
        %v694 = vpop.permute.xlu0 %693
        %vm696 = vcmask 162944
        %697 = vst.msk [vmem:[#allocation2] sm:$0xff] %vm696, %v694
        %698 = vrot.lane.b32.xlu0 %v275, 108
        %v699 = vpop.permute.xlu0 %698
        %700 = vrot.lane.b32.xlu0 %v275, 76
        %v701 = vpop.permute.xlu0 %700
        %v702 = vsel %vm280, %v699, 0
        %v704 = vsel %vm280, %v701, 0
        %706 = vmatpush.xpose.msra.mxu0 0.0
        %707 = vmatpush.xpose.msra.mxu0 0.0
        %708 = vmatpush.xpose.msra.mxu0 0.0
        %709 = vmatpush.xpose.msra.mxu0 0.0
        %710 = vmatpush.xpose.msra.mxu0 0.0
        %711 = vmatpush.xpose.msra.mxu0 0.0
        %712 = vmatpush.xpose.msra.mxu0 0.0
        %713 = vmatpush.xpose.msra.mxu0 0.0
        %714 = vmatpush.xpose.msra.mxu0 0.0
        %715 = vmatpush.xpose.msra.mxu0 0.0
        %716 = vmatpush.xpose.msra.mxu0 0.0
        %717 = vmatpush.xpose.msra.mxu0 0.0
        %718 = vmatpush.xpose.msra.mxu0 0.0
        %719 = vmatpush.xpose.msra.mxu0 0.0
        %720 = vmatpush.xpose.msra.mxu0 0.0
        %721 = vmatpush.xpose.msra.mxu0 %v704
        %722 = vmatmul.f32.gmra.mxu0 %v702
        %v723 = vpop.f32.mrf.mxu0
        %v724 = vadd.f32 0.0, %v723
        %725 = vdwg.mxu0
        %v726 = vmul.f32 %v724, 0.5
        %v727 = vsel %vm306, %v726, -inf
        %728 = vmax.xlane.f32.xlu0 %v727
        %v729 = vpop.xlane.xlu0 %728
        %v730 = vsub.f32 %v726, %v729
        %v731 = vmul.f32 %v730, 1.442695
        %v732 = vpow.pop %v731
        %v733 = vsel %vm306, %v732, 0.0
        %734 = vadd.xlane.f32.xlu0 %v733
        %v735 = vpop.xlane.xlu0 %734
        %v736 = vrcp.pop %v735
        %v737 = vmul.f32 %v735, %v736
        %v738 = vsub.f32 1.0, %v737
        %v739 = vmul.f32 %v736, %v738
        %v740 = vadd.f32 %v736, %v739
        %vm741 = vweird.f32 %v735
        %vm742 = vweird.f32 %v736
        %vm743 = vmor %vm741, %vm742
        %v744 = vsel %vm743, %v736, %v740
        %v745 = vand.u32 2147483647, %v735
        %vm746 = vcmp.eq.f32.partialorder %v745, 8.507059e+37
        %v747 = vand.u32 %v735, 2147483648
        %v748 = vor.u32 1.1754944e-38, %v747
        %v749 = vsel %vm746, %v748, %v744
        %v750 = vmul.f32 %v732, %v749
        %751 = vrot.lane.b32.xlu0 %v275, 44
        %v752 = vpop.permute.xlu0 %751
        %v755 = vsel %vm306, %v750, 0
        %757 = vmatpush.msra.mxu0 0.0
        %758 = vmatpush.msra.mxu0 0.0
        %759 = vmatpush.msra.mxu0 0.0
        %760 = vmatpush.msra.mxu0 0.0
        %761 = vmatpush.msra.mxu0 0.0
        %762 = vmatpush.msra.mxu0 0.0
        %763 = vmatpush.msra.mxu0 0.0
        %764 = vmatpush.msra.mxu0 0.0
        %765 = vmatpush.msra.mxu0 0.0
        %766 = vmatpush.msra.mxu0 0.0
        %767 = vmatpush.msra.mxu0 0.0
        %768 = vmatpush.msra.mxu0 0.0
        %769 = vmatpush.msra.mxu0 0.0
        %770 = vmatpush.msra.mxu0 0.0
        %771 = vmatpush.msra.mxu0 0.0
        %772 = vmatpush.msra.mxu0 %v752
        %773 = vmatmul.f32.gmra.mxu0 %v755
        %v774 = vpop.f32.mrf.mxu0
        %v775 = vadd.f32 0.0, %v774
        %776 = vdwg.mxu0
        %778 = vrot.lane.b32.xlu0 %v775, 20
        %v779 = vpop.permute.xlu0 %778
        %vm781 = vcmask 195744
        %782 = vst.msk [vmem:[#allocation2] sm:$0xff] %vm781, %v779
        %783 = vrot.lane.b32.xlu0 %v275, 104
        %v784 = vpop.permute.xlu0 %783
        %785 = vrot.lane.b32.xlu0 %v275, 72
        %v786 = vpop.permute.xlu0 %785
        %v787 = vsel %vm280, %v784, 0
        %v789 = vsel %vm280, %v786, 0
        %791 = vmatpush.xpose.msra.mxu0 0.0
        %792 = vmatpush.xpose.msra.mxu0 0.0
        %793 = vmatpush.xpose.msra.mxu0 0.0
        %794 = vmatpush.xpose.msra.mxu0 0.0
        %795 = vmatpush.xpose.msra.mxu0 0.0
        %796 = vmatpush.xpose.msra.mxu0 0.0
        %797 = vmatpush.xpose.msra.mxu0 0.0
        %798 = vmatpush.xpose.msra.mxu0 0.0
        %799 = vmatpush.xpose.msra.mxu0 0.0
        %800 = vmatpush.xpose.msra.mxu0 0.0
        %801 = vmatpush.xpose.msra.mxu0 0.0
        %802 = vmatpush.xpose.msra.mxu0 0.0
        %803 = vmatpush.xpose.msra.mxu0 0.0
        %804 = vmatpush.xpose.msra.mxu0 0.0
        %805 = vmatpush.xpose.msra.mxu0 0.0
        %806 = vmatpush.xpose.msra.mxu0 %v789
        %807 = vmatmul.f32.gmra.mxu0 %v787
        %v808 = vpop.f32.mrf.mxu0
        %v809 = vadd.f32 0.0, %v808
        %810 = vdwg.mxu0
        %v811 = vmul.f32 %v809, 0.5
        %v812 = vsel %vm306, %v811, -inf
        %813 = vmax.xlane.f32.xlu0 %v812
        %v814 = vpop.xlane.xlu0 %813
        %v815 = vsub.f32 %v811, %v814
        %v816 = vmul.f32 %v815, 1.442695
        %v817 = vpow.pop %v816
        %v818 = vsel %vm306, %v817, 0.0
        %819 = vadd.xlane.f32.xlu0 %v818
        %v820 = vpop.xlane.xlu0 %819
        %v821 = vrcp.pop %v820
        %v822 = vmul.f32 %v820, %v821
        %v823 = vsub.f32 1.0, %v822
        %v824 = vmul.f32 %v821, %v823
        %v825 = vadd.f32 %v821, %v824
        %vm826 = vweird.f32 %v820
        %vm827 = vweird.f32 %v821
        %vm828 = vmor %vm826, %vm827
        %v829 = vsel %vm828, %v821, %v825
        %v830 = vand.u32 2147483647, %v820
        %vm831 = vcmp.eq.f32.partialorder %v830, 8.507059e+37
        %v832 = vand.u32 %v820, 2147483648
        %v833 = vor.u32 1.1754944e-38, %v832
        %v834 = vsel %vm831, %v833, %v829
        %v835 = vmul.f32 %v817, %v834
        %836 = vrot.lane.b32.xlu0 %v275, 40
        %v837 = vpop.permute.xlu0 %836
        %v840 = vsel %vm306, %v835, 0
        %842 = vmatpush.msra.mxu0 0.0
        %843 = vmatpush.msra.mxu0 0.0
        %844 = vmatpush.msra.mxu0 0.0
        %845 = vmatpush.msra.mxu0 0.0
        %846 = vmatpush.msra.mxu0 0.0
        %847 = vmatpush.msra.mxu0 0.0
        %848 = vmatpush.msra.mxu0 0.0
        %849 = vmatpush.msra.mxu0 0.0
        %850 = vmatpush.msra.mxu0 0.0
        %851 = vmatpush.msra.mxu0 0.0
        %852 = vmatpush.msra.mxu0 0.0
        %853 = vmatpush.msra.mxu0 0.0
        %854 = vmatpush.msra.mxu0 0.0
        %855 = vmatpush.msra.mxu0 0.0
        %856 = vmatpush.msra.mxu0 0.0
        %857 = vmatpush.msra.mxu0 %v837
        %858 = vmatmul.f32.gmra.mxu0 %v840
        %v859 = vpop.f32.mrf.mxu0
        %v860 = vadd.f32 0.0, %v859
        %861 = vdwg.mxu0
        %863 = vrot.lane.b32.xlu0 %v860, 24
        %v864 = vpop.permute.xlu0 %863
        %vm866 = vcmask 228544
        %867 = vst.msk [vmem:[#allocation2] sm:$0xff] %vm866, %v864
        %868 = vrot.lane.b32.xlu0 %v275, 100
        %v869 = vpop.permute.xlu0 %868
        %870 = vrot.lane.b32.xlu0 %v275, 68
        %v871 = vpop.permute.xlu0 %870
        %v872 = vsel %vm280, %v869, 0
        %v874 = vsel %vm280, %v871, 0
        %876 = vmatpush.xpose.msra.mxu0 0.0
        %877 = vmatpush.xpose.msra.mxu0 0.0
        %878 = vmatpush.xpose.msra.mxu0 0.0
        %879 = vmatpush.xpose.msra.mxu0 0.0
        %880 = vmatpush.xpose.msra.mxu0 0.0
        %881 = vmatpush.xpose.msra.mxu0 0.0
        %882 = vmatpush.xpose.msra.mxu0 0.0
        %883 = vmatpush.xpose.msra.mxu0 0.0
        %884 = vmatpush.xpose.msra.mxu0 0.0
        %885 = vmatpush.xpose.msra.mxu0 0.0
        %886 = vmatpush.xpose.msra.mxu0 0.0
        %887 = vmatpush.xpose.msra.mxu0 0.0
        %888 = vmatpush.xpose.msra.mxu0 0.0
        %889 = vmatpush.xpose.msra.mxu0 0.0
        %890 = vmatpush.xpose.msra.mxu0 0.0
        %891 = vmatpush.xpose.msra.mxu0 %v874
        %892 = vmatmul.f32.gmra.mxu0 %v872
        %v893 = vpop.f32.mrf.mxu0
        %v894 = vadd.f32 0.0, %v893
        %895 = vdwg.mxu0
        %v896 = vmul.f32 %v894, 0.5
        %v897 = vsel %vm306, %v896, -inf
        %898 = vmax.xlane.f32.xlu0 %v897
        %v899 = vpop.xlane.xlu0 %898
        %v900 = vsub.f32 %v896, %v899
        %v901 = vmul.f32 %v900, 1.442695
        %v902 = vpow.pop %v901
        %v903 = vsel %vm306, %v902, 0.0
        %904 = vadd.xlane.f32.xlu0 %v903
        %v905 = vpop.xlane.xlu0 %904
        %v906 = vrcp.pop %v905
        %v907 = vmul.f32 %v905, %v906
        %v908 = vsub.f32 1.0, %v907
        %v909 = vmul.f32 %v906, %v908
        %v910 = vadd.f32 %v906, %v909
        %vm911 = vweird.f32 %v905
        %vm912 = vweird.f32 %v906
        %vm913 = vmor %vm911, %vm912
        %v914 = vsel %vm913, %v906, %v910
        %v915 = vand.u32 2147483647, %v905
        %vm916 = vcmp.eq.f32.partialorder %v915, 8.507059e+37
        %v917 = vand.u32 %v905, 2147483648
        %v918 = vor.u32 1.1754944e-38, %v917
        %v919 = vsel %vm916, %v918, %v914
        %v920 = vmul.f32 %v902, %v919
        %921 = vrot.lane.b32.xlu0 %v275, 36
        %v922 = vpop.permute.xlu0 %921
        %v925 = vsel %vm306, %v920, 0
        %927 = vmatpush.msra.mxu0 0.0
        %928 = vmatpush.msra.mxu0 0.0
        %929 = vmatpush.msra.mxu0 0.0
        %930 = vmatpush.msra.mxu0 0.0
        %931 = vmatpush.msra.mxu0 0.0
        %932 = vmatpush.msra.mxu0 0.0
        %933 = vmatpush.msra.mxu0 0.0
        %934 = vmatpush.msra.mxu0 0.0
        %935 = vmatpush.msra.mxu0 0.0
        %936 = vmatpush.msra.mxu0 0.0
        %937 = vmatpush.msra.mxu0 0.0
        %938 = vmatpush.msra.mxu0 0.0
        %939 = vmatpush.msra.mxu0 0.0
        %940 = vmatpush.msra.mxu0 0.0
        %941 = vmatpush.msra.mxu0 0.0
        %942 = vmatpush.msra.mxu0 %v922
        %943 = vmatmul.f32.gmra.mxu0 %v925
        %v944 = vpop.f32.mrf.mxu0
        %v945 = vadd.f32 0.0, %v944
        %946 = vdwg.mxu0
        %948 = vrot.lane.b32.xlu0 %v945, 28
        %v949 = vpop.permute.xlu0 %948
        %vm951 = vcmask 261344
        %952 = vst.msk [vmem:[#allocation2] sm:$0xff] %vm951, %v949
        %v953 = vld [vmem:[#allocation2] sm:$0xff]
        %v954 = vld [vmem:[#allocation8] sm:$0xff]
        %v955 = vld [vmem:[#allocation8 + $0x8] sm:$0xff]
        %v956 = vld [vmem:[#allocation8 + $0x10] sm:$0xff]
        %v957 = vld [vmem:[#allocation8 + $0x18] sm:$0xff]
        %v958 = vld [vmem:[%s3] sm:$0x1]
        %v960 = vperm.slane %v958, 0
        %v963 = vsel %vm253, %v953, 0
        %965 = vmatpush.msra.mxu0 0.0
        %966 = vmatpush.msra.mxu0 0.0
        %967 = vmatpush.msra.mxu0 0.0
        %968 = vmatpush.msra.mxu0 0.0
        %969 = vmatpush.msra.mxu0 0.0
        %970 = vmatpush.msra.mxu0 0.0
        %971 = vmatpush.msra.mxu0 0.0
        %972 = vmatpush.msra.mxu0 0.0
        %973 = vmatpush.msra.mxu0 0.0
        %974 = vmatpush.msra.mxu0 0.0
        %975 = vmatpush.msra.mxu0 0.0
        %976 = vmatpush.msra.mxu0 0.0
        %977 = vmatpush.msra.mxu0 %v957
        %978 = vmatpush.msra.mxu0 %v956
        %979 = vmatpush.msra.mxu0 %v955
        %980 = vmatpush.msra.mxu0 %v954
        %981 = vmatmul.f32.gmra.mxu0 %v963
        %v982 = vpop.f32.mrf.mxu0
        %v983 = vadd.f32 %v960, %v982
        %984 = vdwg.mxu0
        %985 = vst.msk [vmem:[%s247] sm:$0xff] %vm253, %v983
        %s986 = sand.u32 %s119, 1
        %s987 = scalar_lea.sflag [#allocation5], %s986
        %s988 = sand.u32 %s119, 1
        %s989 = smul.addr %s988, 8
        %s990 = scalar_lea.vmem [#allocation9], %s989
        // Predicated region
        $region49: #{tpu_custom_call.1} parent=35 // pred_check
          %p991 = pneg %p129
        $region50: #{tpu_custom_call.1} parent=35 // pred_check_branch
          %993 = sbr.rel (%p991) target = $region52
        $region51: #{tpu_custom_call.1} parent=35 // pred_region
          %995 = vsyncadd %s987, 0
          %s996 = smul.addr %s22, 8
          %s997 = scalar_lea.hbm %s4, %s996
          %s999 = sshll.u32 %s990, 4
          %s1000 = int_to_ptr.vmem [resolvable:$true] %s999
          %s1001 = sshll.u32 %s997, 4
          %s1002 = int_to_ptr.hbm [resolvable:$true] %s1001
          %1004 = dma.vmem_to_hbm [thread:$0]  %s1000, 128, %s1002, %s987
        $region52: #{tpu_custom_call.1} parent=35 // pred_fallthru
          _
      $region36: #{tpu_custom_call.1} parent=5 // pred_fallthru
        _
      %p1005 = scmp.le.s32.totalorder 2, %s17
      // Predicated region
      $region53: #{tpu_custom_call.1} parent=5 // pred_check
        %p1006 = pneg %p1005
      $region54: #{tpu_custom_call.1} parent=5 // pred_check_branch
        %1008 = sbr.rel (%p1006) target = $region56
      $region55: #{tpu_custom_call.1} parent=5 // pred_region
        %s1009 = ssub.s32 %s17, 2
        // Predicated region
        $region57: #{tpu_custom_call.1} parent=55 // pred_check
          %p1010 = pneg %p135
        $region58: #{tpu_custom_call.1} parent=55 // pred_check_branch
          %1012 = sbr.rel (%p1010) target = $region60
        $region59: #{tpu_custom_call.1} parent=55 // pred_region
          %s1013 = sand.u32 %s120, 1
          %s1014 = scalar_lea.sflag [#allocation5], %s1013
          %s1015 = sand.u32 %s120, 1
          %s1016 = smul.addr %s1015, 8
          %s1017 = scalar_lea.vmem [#allocation9], %s1016
          %1019 = dma.done %s1014, 128
        $region60: #{tpu_custom_call.1} parent=55 // pred_fallthru
          _
      $region56: #{tpu_custom_call.1} parent=5 // pred_fallthru
        _
    $region6: #{tpu_custom_call.1} parent=1 // loop_footer
      %s21 = sadd.s32 1, %s17
    $region7: #{tpu_custom_call.1} parent=1 // loop_footer_branch
      %16 = sbr.rel target = $region3
    $region8: #{tpu_custom_call.1} parent=1 // loop_exit
      _
    %1020 = vsyncpa [#allocation4], 1
    %s1021 = scalar_lea.sflag [#allocation4], 1
    %1022 = vsyncpa %s1021, 1
    %1023 = vsyncpa [#allocation7], 1
    %1024 = vsyncpa [#allocation5], 1
    %s1025 = scalar_lea.sflag [#allocation5], 1
    %1026 = vsyncpa %s1025, 1

</llo_original>
